<compile_context>
chip_gen: v5e
topology: v5e:2x2
jax: 0.10.0
libtpu: 0.0.40
codegen_flags: <defaults>
</compile_context>

<pallas_src>
import math
import jax
import jax.numpy as jnp
from jax.experimental import pallas as pl
from jax.experimental.pallas import tpu as pltpu

_LANE = 128


def _dsv_matmul_kernel(x_ref, w_ref, b_ref, o_ref):
    # x_ref: (K, tm)   w_ref: (n_out, K)   b_ref: (n_out, 1)   o_ref: (n_out, tm)
    acc = jnp.dot(w_ref[...], x_ref[...], preferred_element_type=jnp.float32)
    o_ref[...] = (acc + b_ref[...]).astype(o_ref.dtype)


def unet_dsv3_forward(x, weight, bias, scale_factor):
    """ConvTranspose3d with kernel=stride=scale_factor, padding=0.

    x      : (N, C_in, D, H, W)      float32
    weight : (C_in, C_out, s, s, s)  float32  (PyTorch ConvTranspose3d layout)
    bias   : (C_out,)                float32
    returns: (N, C_out, D*s, H*s, W*s)
    """
    n, c_in, d, h, w = x.shape
    s = int(scale_factor)
    c_out = weight.shape[1]
    n_out = c_out * s * s * s
    m = d * h * w

    # ---- operands (no transpose of x: pure reshape keeps NCDHW HBM layout) --
    x3 = x.reshape(n, c_in, m)                       # (N, K, M), M on lanes
    wT = weight.reshape(c_in, n_out).T               # (n_out, K), rows (o,kd,kh,kw)
    b2 = jnp.repeat(bias, s * s * s).reshape(n_out, 1)

    # ---- lane-dense M tiling, VMEM-budgeted (fits v5e/v6e/v7x) --------------
    bytes_per_elem = x.dtype.itemsize
    vmem_budget = 8 * 1024 * 1024                    # double-buffered x + y tiles
    tm = vmem_budget // (2 * bytes_per_elem * (c_in + n_out))
    tm = max(_LANE, (tm // _LANE) * _LANE)
    tm = min(tm, 4096)
    m_rounded = pl.cdiv(m, _LANE) * _LANE
    tm = min(tm, m_rounded)
    m_pad = pl.cdiv(m, tm) * tm

    if m_pad != m:
        x3 = jnp.pad(x3, ((0, 0), (0, 0), (0, m_pad - m)))

    grid = (n, m_pad // tm)

    y3 = pl.pallas_call(
        _dsv_matmul_kernel,
        out_shape=jax.ShapeDtypeStruct((n, n_out, m_pad), x.dtype),
        grid_spec=pltpu.PrefetchScalarGridSpec(
            num_scalar_prefetch=0,
            grid=grid,
            in_specs=[
                pl.BlockSpec((None, c_in, tm), lambda nb, j: (nb, 0, j)),
                pl.BlockSpec((n_out, c_in), lambda nb, j: (0, 0)),
                pl.BlockSpec((n_out, 1), lambda nb, j: (0, 0)),
            ],
            out_specs=pl.BlockSpec((None, n_out, tm), lambda nb, j: (nb, 0, j)),
        ),
        compiler_params=pltpu.CompilerParams(
            dimension_semantics=("parallel", "parallel")),
    )(x3, wT, b2)

    # ---- glue: drop padding, scatter the s^3 sub-blocks into the volume -----
    # (N, n_out, M) -> (N, C_out, s, s, s, D, H, W) -> (N, C_out, D*s, H*s, W*s)
    y = y3[:, :, :m].reshape(n, c_out, s, s, s, d, h, w)
    y = jnp.transpose(y, (0, 1, 5, 2, 6, 3, 7, 4)).reshape(
        n, c_out, d * s, h * s, w * s)
    return y
    # TODO(synk): if upstream activations are bf16, feed them through directly
    # (MXU takes bf16, f32 accumulate) to halve x HBM traffic on v6e/v7x;
    # casting f32 inputs in the wrapper would add an extra HBM pass, so skipped.


def _reference_conv_transpose3d(x, weight, bias, s):
    """Pure-JAX reference (direct formula) for correctness checking."""
    n, c_in, d, h, w = x.shape
    c_out = weight.shape[1]
    y = jnp.einsum("ncdhw,coijk->nodihjwk", x, weight)
    y = y.reshape(n, c_out, d * s, h * s, w * s)
    return y + bias.reshape(1, c_out, 1, 1, 1)


def _run_case(key, in_size, out_size, scale_factor, N, D, H, W):
    k1, k2, k3 = jax.random.split(key, 3)
    fan_in = out_size * scale_factor ** 3
    bound = 1.0 / math.sqrt(fan_in)
    weight = jax.random.uniform(
        k1, (in_size, out_size, scale_factor, scale_factor, scale_factor),
        dtype=jnp.float32, minval=-bound, maxval=bound)
    bias = jax.random.uniform(
        k2, (out_size,), dtype=jnp.float32, minval=-bound, maxval=bound)
    x = jax.random.normal(k3, (N, in_size, D, H, W), dtype=jnp.float32)

    y = jax.block_until_ready(unet_dsv3_forward(x, weight, bias, scale_factor))
    y_ref = _reference_conv_transpose3d(x, weight, bias, scale_factor)
    assert y.shape == (N, out_size, D * scale_factor, H * scale_factor,
                       W * scale_factor)
    assert jnp.allclose(y, y_ref, atol=1e-5, rtol=1e-5)


if __name__ == "__main__":
    key = jax.random.PRNGKey(0)
    ka, kb = jax.random.split(key, 2)

    # Small shapes consistent with UnetDsv3(in_size=8, out_size=4, scale_factor=2)
    _run_case(ka, in_size=8, out_size=4, scale_factor=2, N=2, D=4, H=4, W=4)
    # Ragged spatial size (D*H*W=216 not a lane multiple) to exercise padding.
    _run_case(kb, in_size=8, out_size=4, scale_factor=2, N=2, D=6, H=6, W=6)

    print("KERNEL_OK")
</pallas_src>

<mosaic_0001>
module attributes {stable_mosaic.version = 11 : i64} {
  func.func @_dsv_matmul_kernel(%arg0: i32, %arg1: i32, %arg2: memref<1x8x128xf32, #tpu.memory_space<vmem>>, %arg3: memref<32x8xf32, #tpu.memory_space<vmem>>, %arg4: memref<32x1xf32, #tpu.memory_space<vmem>>, %arg5: memref<1x32x128xf32, #tpu.memory_space<vmem>>) attributes {dimension_semantics = [#tpu.dimension_semantics<parallel>, #tpu.dimension_semantics<parallel>], iteration_bounds = array<i64: 2, 1>, scalar_prefetch = 0 : i64, scratch_operands = 0 : i64, tpu.core_type = #tpu.core_type<tc>, window_params = [{transform_indices = @transform_0, window_bounds = array<i64: 1, 8, 128>}, {pipeline_mode = #tpu.pipeline_mode<synchronous>, transform_indices = @transform_1, window_bounds = array<i64: 32, 8>}, {pipeline_mode = #tpu.pipeline_mode<synchronous>, transform_indices = @transform_2, window_bounds = array<i64: 32, 1>}, {transform_indices = @transform_3, window_bounds = array<i64: 1, 32, 128>}]} {
    %c0 = arith.constant 0 : index
    %c0_0 = arith.constant 0 : index
    %0 = vector.load %arg3[%c0, %c0_0] : memref<32x8xf32, #tpu.memory_space<vmem>>, vector<32x8xf32>
    %c0_1 = arith.constant 0 : index
    %c0_2 = arith.constant 0 : index
    %c0_3 = arith.constant 0 : index
    %1 = vector.load %arg2[%c0_1, %c0_2, %c0_3] : memref<1x8x128xf32, #tpu.memory_space<vmem>>, vector<1x8x128xf32>
    %2 = vector.shape_cast %1 : vector<1x8x128xf32> to vector<8x128xf32>
    %cst = arith.constant dense<0.000000e+00> : vector<32x128xf32>
    %3 = tpu.matmul %0, %2, %cst {dimension_numbers = #tpu.dot_dimension_numbers<[1], [0], [0], [1], [0, 0, 1, 1], [], []>} : vector<32x8xf32>, vector<8x128xf32>, vector<32x128xf32> -> vector<32x128xf32>
    %c0_4 = arith.constant 0 : index
    %c0_5 = arith.constant 0 : index
    %4 = vector.load %arg4[%c0_4, %c0_5] : memref<32x1xf32, #tpu.memory_space<vmem>>, vector<32x1xf32>
    %5 = vector.broadcast %4 : vector<32x1xf32> to vector<32x128xf32>
    %6 = arith.addf %3, %5 : vector<32x128xf32>
    %c0_6 = arith.constant 0 : index
    %c0_7 = arith.constant 0 : index
    %c0_8 = arith.constant 0 : index
    %7 = vector.load %arg5[%c0_6, %c0_7, %c0_8] : memref<1x32x128xf32, #tpu.memory_space<vmem>>, vector<1x32x128xf32>
    %8 = vector.shape_cast %7 : vector<1x32x128xf32> to vector<32x128xf32>
    %9 = vector.shape_cast %6 : vector<32x128xf32> to vector<1x32x128xf32>
    tpu.vector_store %arg5[%c0_6, %c0_7, %c0_8], %9 {strides = array<i32>} : memref<1x32x128xf32, #tpu.memory_space<vmem>>, vector<1x32x128xf32>,
    return
  }
  func.func @transform_0(%arg0: i32, %arg1: i32) -> (i32, i32, i32) {
    %c0_i32 = arith.constant 0 : i32
    %c0_i32_0 = arith.constant 0 : i32
    return %arg0, %c0_i32, %arg1 : i32, i32, i32
  }
  func.func @transform_1(%arg0: i32, %arg1: i32) -> (i32, i32) {
    %c0_i32 = arith.constant 0 : i32
    %c0_i32_0 = arith.constant 0 : i32
    %c0_i32_1 = arith.constant 0 : i32
    return %c0_i32, %c0_i32_0 : i32, i32
  }
  func.func @transform_2(%arg0: i32, %arg1: i32) -> (i32, i32) {
    %c0_i32 = arith.constant 0 : i32
    %c0_i32_0 = arith.constant 0 : i32
    %c0_i32_1 = arith.constant 0 : i32
    return %c0_i32, %c0_i32_0 : i32, i32
  }
  func.func @transform_3(%arg0: i32, %arg1: i32) -> (i32, i32, i32) {
    %c0_i32 = arith.constant 0 : i32
    %c0_i32_0 = arith.constant 0 : i32
    return %arg0, %c0_i32, %arg1 : i32, i32, i32
  }
}

</mosaic_0001>

<llo_original>
// kernel: tpu_custom_call.1
$region0: #{tpu_custom_call.1}
  #allocation0 [shape = 'u32[]', space=smem, size = 0x4, offset = 0x4, fixed_abs, tag = 'smem constant byte address 0x4 - core index']
  #allocation1 [shape = 'u32[72,128]{1,0:T(1,128)}', space=vmem, size = 0x9000, scoped, tag = 'internal scratch']
  %s0 = inlined_call_operand.vmem [shape: f32[2,8,128], index: 0, kind: input, shape index: {}]
  %s1 = inlined_call_operand.vmem [shape: f32[32,8], index: 1, kind: input, shape index: {}]
  %s2 = inlined_call_operand.vmem [shape: f32[32,1], index: 2, kind: input, shape index: {}]
  %s3 = inlined_call_operand.hbm [shape: f32[2,32,128], index: 3, kind: output, shape index: {}]
  %s4 = sld [smem:[#allocation0]]
  $region45: #{tpu_custom_call.1} parent=0
    _
  %s6 = ssub.s32 1, %s4
  %s7 = scalar_select 0, %s6, %s4
  $region1: #{tpu_custom_call.1} parent=0
    #allocation2 [shape = 'u8[32768]{0}', space=vmem, size = 0x8000, scoped, tag = 'output window, operand 0']
    #allocation3 [shape = 's32[2]{0}', space=sflag, size = 0x8, scoped, tag = 'scoped memory for tpu_custom_call.1']
    %8 = vsyncpa [#allocation3], 0
    %s9 = scalar_lea.sflag [#allocation3], 1
    %10 = vsyncpa %s9, 0
    loop: start=0, step=1, limit=4
    $region2: #{tpu_custom_call.1} parent=1 // loop_pre_header
      _
    $region3: #{tpu_custom_call.1} parent=1 // loop_header
      %s12 = sphi 0, %s16
      %p13 = scmp.ge.s32.totalorder %s12, 4
      %s19 = sphi 0, %s31
      %s20 = sphi 0, %s27
      %s21 = sphi 0, %s19
      %s22 = sphi 0, %s20
      %s23 = sphi 0, %s21
      %s24 = sphi 0, %s22
      %s36 = sphi 0, %s38
      %s39 = sphi 0, %s36
      %s40 = sphi 0, %s39
      %s56 = sphi 0, %s40
      %s60 = sphi 0, %s60
      %s62 = sphi 0, %s60
      %s63 = sphi 0, %s62
      %s77 = sphi 0, %s63
      %s81 = sphi 0, %s81
      %s83 = sphi 0, %s81
      %s84 = sphi 0, %s83
      %s98 = sphi 0, %s84
      %s106 = sphi 0, %s108
      %s109 = sphi 0, %s106
      %s110 = sphi 0, %s109
      %s126 = sphi 0, %s110
    $region4: #{tpu_custom_call.1} parent=1 // loop_header_branch
      %15 = sbr.rel (%p13) target = $region8
    $region5: #{tpu_custom_call.1} parent=1 // loop_body
      %s17 = ssub.s32 %s12, 1
      %s18 = ssub.s32 %s12, 2
      %s25 = sadd.s32 1, %s20
      %p26 = scmp.ge.s32.totalorder %s25, 1
      %s27 = scalar_select %p26, 0, %s25
      %s28 = sadd.s32 1, %s19
      %s29 = scalar_select %p26, %s28, %s19
      %p30 = scmp.ge.s32.totalorder %s29, 2
      %s31 = scalar_select %p30, 0, %s29
      %s32 = ssub.s32 %s19, %s31
      %s33 = ssub.s32 %s20, %s27
      %s34 = sor.u32 %s32, %s33
      %p35 = scmp.eq.s32.totalorder %s34, 0
      %s37 = sadd.s32 %s36, 1
      %s38 = scalar_select %p35, %s36, %s37
      %p41 = pneg %p35
      %p42 = scmp.eq.s32.totalorder %s12, 1
      %p43 = por %p41, %p42
      %p44 = scmp.ne.s32.totalorder %s36, %s39
      %p45 = scmp.eq.s32.totalorder %s12, 0
      %p46 = por %p44, %p45
      %p47 = scmp.ne.s32.totalorder %s36, %s39
      %p48 = scmp.eq.s32.totalorder %s17, 1
      %p49 = por %p47, %p48
      %p50 = scmp.ne.s32.totalorder %s39, %s40
      %p51 = scmp.eq.s32.totalorder %s17, 0
      %p52 = por %p50, %p51
      %p53 = scmp.ne.s32.totalorder %s39, %s40
      %p54 = scmp.eq.s32.totalorder %s18, 1
      %p55 = por %p53, %p54
      %p57 = scmp.ne.s32.totalorder %s40, %s56
      %p58 = scmp.eq.s32.totalorder %s18, 0
      %p59 = por %p57, %p58
      %s61 = sadd.s32 %s60, 1
      %p64 = scmp.eq.s32.totalorder %s12, 1
      %p65 = scmp.ne.s32.totalorder %s60, %s62
      %p66 = scmp.eq.s32.totalorder %s12, 0
      %p67 = por %p65, %p66
      %p68 = scmp.ne.s32.totalorder %s60, %s62
      %p69 = scmp.eq.s32.totalorder %s17, 1
      %p70 = por %p68, %p69
      %p71 = scmp.ne.s32.totalorder %s62, %s63
      %p72 = scmp.eq.s32.totalorder %s17, 0
      %p73 = por %p71, %p72
      %p74 = scmp.ne.s32.totalorder %s62, %s63
      %p75 = scmp.eq.s32.totalorder %s18, 1
      %p76 = por %p74, %p75
      %p78 = scmp.ne.s32.totalorder %s63, %s77
      %p79 = scmp.eq.s32.totalorder %s18, 0
      %p80 = por %p78, %p79
      %s82 = sadd.s32 %s81, 1
      %p85 = scmp.eq.s32.totalorder %s12, 1
      %p86 = scmp.ne.s32.totalorder %s81, %s83
      %p87 = scmp.eq.s32.totalorder %s12, 0
      %p88 = por %p86, %p87
      %p89 = scmp.ne.s32.totalorder %s81, %s83
      %p90 = scmp.eq.s32.totalorder %s17, 1
      %p91 = por %p89, %p90
      %p92 = scmp.ne.s32.totalorder %s83, %s84
      %p93 = scmp.eq.s32.totalorder %s17, 0
      %p94 = por %p92, %p93
      %p95 = scmp.ne.s32.totalorder %s83, %s84
      %p96 = scmp.eq.s32.totalorder %s18, 1
      %p97 = por %p95, %p96
      %p99 = scmp.ne.s32.totalorder %s84, %s98
      %p100 = scmp.eq.s32.totalorder %s18, 0
      %p101 = por %p99, %p100
      %s102 = ssub.s32 %s19, %s31
      %s103 = ssub.s32 %s20, %s27
      %s104 = sor.u32 %s102, %s103
      %p105 = scmp.eq.s32.totalorder %s104, 0
      %s107 = sadd.s32 %s106, 1
      %s108 = scalar_select %p105, %s106, %s107
      %p111 = pneg %p105
      %p112 = scmp.eq.s32.totalorder %s12, 1
      %p113 = por %p111, %p112
      %p114 = scmp.ne.s32.totalorder %s106, %s109
      %p115 = scmp.eq.s32.totalorder %s12, 0
      %p116 = por %p114, %p115
      %p117 = scmp.ne.s32.totalorder %s106, %s109
      %p118 = scmp.eq.s32.totalorder %s17, 1
      %p119 = por %p117, %p118
      %p120 = scmp.ne.s32.totalorder %s109, %s110
      %p121 = scmp.eq.s32.totalorder %s17, 0
      %p122 = por %p120, %p121
      %p123 = scmp.ne.s32.totalorder %s109, %s110
      %p124 = scmp.eq.s32.totalorder %s18, 1
      %p125 = por %p123, %p124
      %p127 = scmp.ne.s32.totalorder %s110, %s126
      %p128 = scmp.eq.s32.totalorder %s18, 0
      %p129 = por %p127, %p128
      %p130 = scmp.le.s32.totalorder 1, %s12
      %p131 = scmp.lt.s32.totalorder %s12, 3
      %p132 = pnand %p130, %p131
      %p133 = pneg %p132
      // Predicated region
      $region9: #{tpu_custom_call.1} parent=5 // pred_check
        _
      $region10: #{tpu_custom_call.1} parent=5 // pred_check_branch
        %135 = sbr.rel (%p132) target = $region12
      $region11: #{tpu_custom_call.1} parent=5 // pred_region
        %s136 = ssub.s32 %s12, 1
        // Predicated region
        $region13: #{tpu_custom_call.1} parent=11 // pred_check
          %p137 = pneg %p73
        $region14: #{tpu_custom_call.1} parent=11 // pred_check_branch
          %139 = sbr.rel (%p137) target = $region16
        $region15: #{tpu_custom_call.1} parent=11 // pred_region
          _
        $region16: #{tpu_custom_call.1} parent=11 // pred_fallthru
          _
        // Predicated region
        $region17: #{tpu_custom_call.1} parent=11 // pred_check
          %p140 = pneg %p94
        $region18: #{tpu_custom_call.1} parent=11 // pred_check_branch
          %142 = sbr.rel (%p140) target = $region20
        $region19: #{tpu_custom_call.1} parent=11 // pred_region
          _
        $region20: #{tpu_custom_call.1} parent=11 // pred_fallthru
          _
      $region12: #{tpu_custom_call.1} parent=5 // pred_fallthru
        _
      %p143 = scmp.lt.s32.totalorder %s12, 2
      // Predicated region
      $region21: #{tpu_custom_call.1} parent=5 // pred_check
        %p144 = pneg %p143
      $region22: #{tpu_custom_call.1} parent=5 // pred_check_branch
        %146 = sbr.rel (%p144) target = $region24
      $region23: #{tpu_custom_call.1} parent=5 // pred_region
        // Predicated region
        $region25: #{tpu_custom_call.1} parent=23 // pred_check
          %p147 = pneg %p46
        $region26: #{tpu_custom_call.1} parent=23 // pred_check_branch
          %149 = sbr.rel (%p147) target = $region28
        $region27: #{tpu_custom_call.1} parent=23 // pred_region
          %p150 = scmp.lt.s32.totalorder %s19, 1
          %s151 = scalar_select %p150, %s19, 1
          %p152 = scmp.lt.s32.totalorder %s20, 0
          %s153 = scalar_select %p152, %s20, 0
          %s154 = sadd.s32 %s153, %s151
          %s155 = smul.addr %s154, 8
          %s156 = scalar_lea.vmem %s0, %s155
        $region28: #{tpu_custom_call.1} parent=23 // pred_fallthru
          _
      $region24: #{tpu_custom_call.1} parent=5 // pred_fallthru
        _
      %p157 = scmp.le.s32.totalorder 1, %s12
      %p158 = scmp.lt.s32.totalorder %s12, 3
      %p159 = pnand %p157, %p158
      %p160 = pneg %p159
      // Predicated region
      $region29: #{tpu_custom_call.1} parent=5 // pred_check
        _
      $region30: #{tpu_custom_call.1} parent=5 // pred_check_branch
        %162 = sbr.rel (%p159) target = $region32
      $region31: #{tpu_custom_call.1} parent=5 // pred_region
        %s163 = ssub.s32 %s12, 1
        %p164 = scmp.lt.s32.totalorder %s21, 1
        %s165 = scalar_select %p164, %s21, 1
        %p166 = scmp.lt.s32.totalorder %s22, 0
        %s167 = scalar_select %p166, %s22, 0
        %s168 = sadd.s32 %s167, %s165
        %s169 = smul.addr %s168, 8
        %s170 = scalar_lea.vmem %s0, %s169
        %p171 = pneg %p52
        %p172 = pneg %p49
        %p173 = pneg %p73
        %p174 = pneg %p70
        %p175 = pneg %p94
        %p176 = pneg %p91
        %p177 = pneg %p122
        %p178 = pneg %p119
        %s179 = sand.u32 %s109, 1
        %s180 = scalar_lea.sflag [#allocation3], %s179
        %s181 = sand.u32 %s109, 1
        %s182 = smul.addr %s181, 32
        %s183 = scalar_lea.vmem [#allocation2], %s182
        %p184 = scmp.lt.s32.totalorder %s21, 1
        %s185 = scalar_select %p184, %s21, 1
        %p186 = scmp.lt.s32.totalorder %s22, 0
        %s187 = scalar_select %p186, %s22, 0
        %s188 = sadd.s32 %s187, %s185
        %s189 = smul.addr %s188, 8
        %s190 = scalar_lea.vmem %s0, %s189
        %v191 = vld [vmem:[%s1] sm:$0xff]
        %v192 = vld [vmem:[%s1 + $0x8] sm:$0xff]
        %v193 = vld [vmem:[%s1 + $0x10] sm:$0xff]
        %v194 = vld [vmem:[%s1 + $0x18] sm:$0xff]
        %v195 = vld [vmem:[%s190] sm:$0xff]
        %v196 = vld [vmem:[%s2] sm:$0xff]
        %v197 = vld [vmem:[%s2 + $0x8] sm:$0xff]
        %v198 = vld [vmem:[%s2 + $0x10] sm:$0xff]
        %v199 = vld [vmem:[%s2 + $0x18] sm:$0xff]
        %201 = vset.pattern.permute.xlu0 0
        %202 = vperm.xlu0 %201, %v196
        %v203 = vpop.permute.xlu0 %202
        %206 = vset.pattern.permute.xlu0 0
        %207 = vperm.xlu0 %206, %v197
        %v208 = vpop.permute.xlu0 %207
        %211 = vset.pattern.permute.xlu0 0
        %212 = vperm.xlu0 %211, %v198
        %v213 = vpop.permute.xlu0 %212
        %216 = vset.pattern.permute.xlu0 0
        %217 = vperm.xlu0 %216, %v199
        %v218 = vpop.permute.xlu0 %217
        %vm220 = vcmask 64512
        %v222 = vsel %vm220, %v191, 0
        %v225 = vsel %vm220, %v192, 0
        %v228 = vsel %vm220, %v193, 0
        %v231 = vsel %vm220, %v194, 0
        %233 = vmatpush.msra.mxu0 0.0
        %234 = vmatpush.msra.mxu0 0.0
        %235 = vmatpush.msra.mxu0 0.0
        %236 = vmatpush.msra.mxu0 0.0
        %237 = vmatpush.msra.mxu0 0.0
        %238 = vmatpush.msra.mxu0 0.0
        %239 = vmatpush.msra.mxu0 0.0
        %240 = vmatpush.msra.mxu0 0.0
        %241 = vmatpush.msra.mxu0 0.0
        %242 = vmatpush.msra.mxu0 0.0
        %243 = vmatpush.msra.mxu0 0.0
        %244 = vmatpush.msra.mxu0 0.0
        %245 = vmatpush.msra.mxu0 0.0
        %246 = vmatpush.msra.mxu0 0.0
        %247 = vmatpush.msra.mxu0 0.0
        %248 = vmatpush.msra.mxu0 %v195
        %249 = vmatmul.f32.gmra.mxu0 %v222
        %v250 = vpop.f32.mrf.mxu0
        %v251 = vadd.f32 %v203, %v250
        %252 = vmatmul.f32.gmra.mxu0 %v225
        %v253 = vpop.f32.mrf.mxu0
        %v254 = vadd.f32 %v208, %v253
        %255 = vmatmul.f32.gmra.mxu0 %v228
        %v256 = vpop.f32.mrf.mxu0
        %v257 = vadd.f32 %v213, %v256
        %258 = vmatmul.f32.gmra.mxu0 %v231
        %v259 = vpop.f32.mrf.mxu0
        %v260 = vadd.f32 %v218, %v259
        %261 = vdwg.mxu0
        %262 = vst [vmem:[%s183] sm:$0xff] %v251
        %263 = vst [vmem:[%s183 + $0x8] sm:$0xff] %v254
        %264 = vst [vmem:[%s183 + $0x10] sm:$0xff] %v257
        %265 = vst [vmem:[%s183 + $0x18] sm:$0xff] %v260
        %s266 = sand.u32 %s109, 1
        %s267 = scalar_lea.sflag [#allocation3], %s266
        %s268 = sand.u32 %s109, 1
        %s269 = smul.addr %s268, 32
        %s270 = scalar_lea.vmem [#allocation2], %s269
        // Predicated region
        $region33: #{tpu_custom_call.1} parent=31 // pred_check
          %p271 = pneg %p119
        $region34: #{tpu_custom_call.1} parent=31 // pred_check_branch
          %273 = sbr.rel (%p271) target = $region36
        $region35: #{tpu_custom_call.1} parent=31 // pred_region
          %275 = vsyncadd %s267, 0
          %s276 = smul.addr %s21, 4
          %s277 = sadd.s32 %s22, %s276
          %s278 = smul.addr %s277, 8
          %s279 = scalar_lea.hbm %s3, %s278
          %s280 = sshll.u32 %s270, 4
          %s281 = int_to_ptr.vmem [resolvable:$true] %s280
          %s282 = sshll.u32 %s279, 4
          %s283 = int_to_ptr.hbm [resolvable:$true] %s282
          %288 = dma.vmem_to_hbm [thread:$0]  %s281, 512, %s283, %s267, 128, 128, 8
        $region36: #{tpu_custom_call.1} parent=31 // pred_fallthru
          _
      $region32: #{tpu_custom_call.1} parent=5 // pred_fallthru
        _
      %p289 = scmp.le.s32.totalorder 2, %s12
      // Predicated region
      $region37: #{tpu_custom_call.1} parent=5 // pred_check
        %p290 = pneg %p289
      $region38: #{tpu_custom_call.1} parent=5 // pred_check_branch
        %292 = sbr.rel (%p290) target = $region40
      $region39: #{tpu_custom_call.1} parent=5 // pred_region
        %s293 = ssub.s32 %s12, 2
        // Predicated region
        $region41: #{tpu_custom_call.1} parent=39 // pred_check
          %p294 = pneg %p125
        $region42: #{tpu_custom_call.1} parent=39 // pred_check_branch
          %296 = sbr.rel (%p294) target = $region44
        $region43: #{tpu_custom_call.1} parent=39 // pred_region
          %s297 = sand.u32 %s110, 1
          %s298 = scalar_lea.sflag [#allocation3], %s297
          %s299 = sand.u32 %s110, 1
          %s300 = smul.addr %s299, 32
          %s301 = scalar_lea.vmem [#allocation2], %s300
          %303 = dma.done %s298, 512
        $region44: #{tpu_custom_call.1} parent=39 // pred_fallthru
          _
      $region40: #{tpu_custom_call.1} parent=5 // pred_fallthru
        _
    $region6: #{tpu_custom_call.1} parent=1 // loop_footer
      %s16 = sadd.s32 1, %s12
    $region7: #{tpu_custom_call.1} parent=1 // loop_footer_branch
      %11 = sbr.rel target = $region3
    $region8: #{tpu_custom_call.1} parent=1 // loop_exit
      _
    %304 = vsyncpa [#allocation3], 1
    %s305 = scalar_lea.sflag [#allocation3], 1
    %306 = vsyncpa %s305, 1

</llo_original>
